<compile_context>
chip_gen: v5e
topology: v5e:2x2
jax: 0.10.0
libtpu: 0.0.40
codegen_flags: <defaults>
</compile_context>

<pallas_src>
import jax
import jax.numpy as jnp
from jax.experimental import pallas as pl
from jax.experimental.pallas import tpu as pltpu


def _bernoulli_logprob_kernel(logits_ref, target_ref, out_ref):
    # Upcast to f32 for the exp/log1p path (v5e has no bf16 VPU/EUP); cast back
    # on store. This keeps EUP work at 2 transcendentals/elem, well under the
    # HBM-bound roofline on all generations.
    x = logits_ref[...].astype(jnp.float32)
    y = target_ref[...].astype(jnp.float32)
    # PyTorch's numerically stable BCE-with-logits:
    #   loss = max(x, 0) - x*y + log1p(exp(-|x|))
    loss = jnp.maximum(x, 0.0) - x * y + jnp.log1p(jnp.exp(-jnp.abs(x)))
    out_ref[...] = (-loss).astype(out_ref.dtype)


_LANE_WIDTHS = (8192, 4096, 2048, 1024, 512, 256, 128)
# ~2 MiB per-operand tile (f32): 3 operands x 2 pipeline buffers = 12 MiB of VMEM,
# safe under the default scoped VMEM limit on v5e (16 MiB), v6e (32 MiB), v7x (32 MiB).
_TILE_BYTES_TARGET = 2 * 1024 * 1024


def _choose_layout(n):
    """Return (rows, lanes, row_tile) for a lane-dense factorization of n with
    no host-side padding: row_tile divides rows exactly."""
    # Preferred path: lane width where rows is 8-aligned, so the row axis can be
    # tiled with (8,128)-legal blocks.
    for cand in _LANE_WIDTHS:
        if n % (cand * 8) == 0:
            lanes = cand
            rows = n // cand
            max_tile_rows = max(_TILE_BYTES_TARGET // (lanes * 4), 8)
            if rows <= max_tile_rows:
                return rows, lanes, rows  # small input: single full-array block
            # Largest multiple-of-8 divisor of rows that keeps the tile <= target.
            m = rows // 8
            row_tile = 8
            for g in range(min(m, max_tile_rows // 8), 0, -1):
                if m % g == 0:
                    row_tile = 8 * g
                    break
            return rows, lanes, row_tile
    # Fallbacks for small / ragged sizes: run as one full-array block
    # (block_shape == full array dims is exempt from the (8,128) rule).
    for cand in _LANE_WIDTHS:
        if n % cand == 0:
            return n // cand, cand, n // cand
    # TODO(synk): very large inputs whose size is not a multiple of 128 would
    # need an in-kernel masked tail store; current fallback is one full block.
    return 1, n, 1


def bernoulli_log_prob(logits, target):
    assert logits.shape == target.shape
    orig_shape = logits.shape
    out_dtype = logits.dtype
    n = logits.size

    rows, lanes, row_tile = _choose_layout(n)
    x2 = logits.reshape(rows, lanes)
    y2 = target.reshape(rows, lanes)

    grid = (rows // row_tile,)
    spec = pl.BlockSpec((row_tile, lanes), lambda i: (i, 0))

    out2 = pl.pallas_call(
        _bernoulli_logprob_kernel,
        out_shape=jax.ShapeDtypeStruct((rows, lanes), out_dtype),
        grid_spec=pltpu.PrefetchScalarGridSpec(
            num_scalar_prefetch=0,
            grid=grid,
            in_specs=[spec, spec],
            out_specs=spec,
        ),
        compiler_params=pltpu.CompilerParams(
            dimension_semantics=("parallel",),
        ),
    )(x2, y2)

    return out2.reshape(orig_shape)


def _reference(logits, target):
    x = logits.astype(jnp.float32)
    y = target.astype(jnp.float32)
    loss = jnp.maximum(x, 0.0) - x * y + jnp.log1p(jnp.exp(-jnp.abs(x)))
    return (-loss).astype(logits.dtype)


if __name__ == "__main__":
    key = jax.random.PRNGKey(0)
    k1, k2, k3, k4 = jax.random.split(key, 4)

    # Small NCHW-like shape consistent with a VAE decoder output / binary target.
    B, C, H, W = 2, 4, 16, 16
    logits = jax.random.normal(k1, (B, C, H, W), dtype=jnp.float32) * 3.0
    target = (jax.random.uniform(k2, (B, C, H, W)) > 0.5).astype(jnp.float32)

    out = bernoulli_log_prob(logits, target)
    out = jax.block_until_ready(out)

    ref = _reference(logits, target)
    assert out.shape == (B, C, H, W)
    assert jnp.allclose(out, ref, atol=1e-5, rtol=1e-5), "mismatch vs reference"

    # Second check: ragged size (MNIST-style 28x28) exercising the
    # single-full-array-block fallback (no padding, no output slice).
    logits2 = jax.random.normal(k3, (2, 1, 28, 28), dtype=jnp.float32) * 3.0
    target2 = (jax.random.uniform(k4, (2, 1, 28, 28)) > 0.5).astype(jnp.float32)
    out2 = jax.block_until_ready(bernoulli_log_prob(logits2, target2))
    ref2 = _reference(logits2, target2)
    assert out2.shape == (2, 1, 28, 28)
    assert jnp.allclose(out2, ref2, atol=1e-5, rtol=1e-5), "mismatch vs reference (ragged)"

    print("KERNEL_OK")
</pallas_src>

<mosaic_0001>
module attributes {stable_mosaic.version = 11 : i64} {
  func.func @_bernoulli_logprob_kernel(%arg0: i32, %arg1: memref<8x256xf32, #tpu.memory_space<vmem>>, %arg2: memref<8x256xf32, #tpu.memory_space<vmem>>, %arg3: memref<8x256xf32, #tpu.memory_space<vmem>>) attributes {dimension_semantics = [#tpu.dimension_semantics<parallel>], iteration_bounds = array<i64: 1>, scalar_prefetch = 0 : i64, scratch_operands = 0 : i64, tpu.core_type = #tpu.core_type<tc>, window_params = [{transform_indices = @transform_0, window_bounds = array<i64: 8, 256>}, {transform_indices = @transform_1, window_bounds = array<i64: 8, 256>}, {transform_indices = @transform_2, window_bounds = array<i64: 8, 256>}]} {
    %c0 = arith.constant 0 : index
    %c0_0 = arith.constant 0 : index
    %0 = vector.load %arg1[%c0, %c0_0] : memref<8x256xf32, #tpu.memory_space<vmem>>, vector<8x256xf32>
    %c0_1 = arith.constant 0 : index
    %c0_2 = arith.constant 0 : index
    %1 = vector.load %arg2[%c0_1, %c0_2] : memref<8x256xf32, #tpu.memory_space<vmem>>, vector<8x256xf32>
    %cst = arith.constant 0.000000e+00 : f32
    %2 = vector.broadcast %cst : f32 to vector<8x256xf32>
    %3 = arith.maximumf %0, %2 : vector<8x256xf32>
    %4 = arith.mulf %0, %1 : vector<8x256xf32>
    %5 = arith.subf %3, %4 : vector<8x256xf32>
    %6 = math.absf %0 : vector<8x256xf32>
    %cst_3 = arith.constant 0.000000e+00 : f32
    %7 = vector.broadcast %cst_3 : f32 to vector<8x256xf32>
    %8 = arith.subf %7, %6 : vector<8x256xf32>
    %9 = math.exp %8 : vector<8x256xf32>
    %10 = math.log1p %9 : vector<8x256xf32>
    %11 = arith.addf %5, %10 : vector<8x256xf32>
    %cst_4 = arith.constant 0.000000e+00 : f32
    %12 = vector.broadcast %cst_4 : f32 to vector<8x256xf32>
    %13 = arith.subf %12, %11 : vector<8x256xf32>
    %c0_5 = arith.constant 0 : index
    %c0_6 = arith.constant 0 : index
    %14 = vector.load %arg3[%c0_5, %c0_6] : memref<8x256xf32, #tpu.memory_space<vmem>>, vector<8x256xf32>
    tpu.vector_store %arg3[%c0_5, %c0_6], %13 {strides = array<i32>} : memref<8x256xf32, #tpu.memory_space<vmem>>, vector<8x256xf32>,
    return
  }
  func.func @transform_0(%arg0: i32) -> (i32, i32) {
    %c0_i32 = arith.constant 0 : i32
    %c0_i32_0 = arith.constant 0 : i32
    return %arg0, %c0_i32 : i32, i32
  }
  func.func @transform_1(%arg0: i32) -> (i32, i32) {
    %c0_i32 = arith.constant 0 : i32
    %c0_i32_0 = arith.constant 0 : i32
    return %arg0, %c0_i32 : i32, i32
  }
  func.func @transform_2(%arg0: i32) -> (i32, i32) {
    %c0_i32 = arith.constant 0 : i32
    %c0_i32_0 = arith.constant 0 : i32
    return %arg0, %c0_i32 : i32, i32
  }
}

</mosaic_0001>

<llo_original>
// kernel: tpu_custom_call.1
$region0: #{tpu_custom_call.1}
  #allocation0 [shape = 'u32[]', space=smem, size = 0x4, offset = 0x4, fixed_abs, tag = 'smem constant byte address 0x4 - core index']
  #allocation1 [shape = 'u32[72,128]{1,0:T(1,128)}', space=vmem, size = 0x9000, scoped, tag = 'internal scratch']
  %s0 = inlined_call_operand.hbm [shape: f32[8,256], index: 0, kind: input, shape index: {}]
  %s1 = inlined_call_operand.hbm [shape: f32[8,256], index: 1, kind: input, shape index: {}]
  %s2 = inlined_call_operand.hbm [shape: f32[8,256], index: 2, kind: output, shape index: {}]
  %s3 = sld [smem:[#allocation0]]
  $region26: #{tpu_custom_call.1} parent=0
    _
  %s5 = ssub.s32 1, %s3
  %s6 = scalar_select 0, %s5, %s3
  $region1: #{tpu_custom_call.1} parent=0
    #allocation2 [shape = 'u8[8192]{0}', space=vmem, size = 0x2000, scoped, tag = 'input window, operand 0, single buffered']
    #allocation3 [shape = 's32[1]{0}', space=sflag, size = 0x4, scoped, tag = 'scoped memory for tpu_custom_call.1']
    #allocation4 [shape = 's32[1]{0}', space=sflag, size = 0x4, scoped, tag = 'scoped memory for tpu_custom_call.1']
    #allocation5 [shape = 'u8[8192]{0}', space=vmem, size = 0x2000, scoped, tag = 'input window, operand 1, single buffered']
    #allocation6 [shape = 's32[1]{0}', space=sflag, size = 0x4, scoped, tag = 'scoped memory for tpu_custom_call.1']
    #allocation7 [shape = 'u8[8192]{0}', space=vmem, size = 0x2000, scoped, tag = 'output window, operand 0, single buffered']
    %7 = vsyncpa [#allocation3], 0
    %8 = vsyncpa [#allocation6], 0
    %9 = vsyncpa [#allocation4], 0
    // Predicated region
    $region2: #{tpu_custom_call.1} parent=1 // pred_check
      _
    $region3: #{tpu_custom_call.1} parent=1 // pred_check_branch
      %11 = sbr.rel (0) target = $region5
    $region4: #{tpu_custom_call.1} parent=1 // pred_region
      %13 = vsyncadd [#allocation3], 0
      %s15 = sshll.u32 %s0, 4
      %s16 = int_to_ptr.hbm [resolvable:$true] %s15
      %s17 = sshll.u32 [#allocation2], 4
      %s18 = int_to_ptr.vmem [resolvable:$true] %s17
      %20 = dma.hbm_to_vmem [thread:$0]  %s16, 256, %s18, [#allocation3]
    $region5: #{tpu_custom_call.1} parent=1 // pred_fallthru
      _
    // Predicated region
    $region6: #{tpu_custom_call.1} parent=1 // pred_check
      _
    $region7: #{tpu_custom_call.1} parent=1 // pred_check_branch
      %22 = sbr.rel (0) target = $region9
    $region8: #{tpu_custom_call.1} parent=1 // pred_region
      %24 = vsyncadd [#allocation6], 0
      %s26 = sshll.u32 %s1, 4
      %s27 = int_to_ptr.hbm [resolvable:$true] %s26
      %s28 = sshll.u32 [#allocation5], 4
      %s29 = int_to_ptr.vmem [resolvable:$true] %s28
      %31 = dma.hbm_to_vmem [thread:$0]  %s27, 256, %s29, [#allocation6]
    $region9: #{tpu_custom_call.1} parent=1 // pred_fallthru
      _
    // Predicated region
    $region10: #{tpu_custom_call.1} parent=1 // pred_check
      _
    $region11: #{tpu_custom_call.1} parent=1 // pred_check_branch
      %33 = sbr.rel (0) target = $region13
    $region12: #{tpu_custom_call.1} parent=1 // pred_region
      %35 = dma.done [#allocation3], 256
    $region13: #{tpu_custom_call.1} parent=1 // pred_fallthru
      _
    // Predicated region
    $region14: #{tpu_custom_call.1} parent=1 // pred_check
      _
    $region15: #{tpu_custom_call.1} parent=1 // pred_check_branch
      %37 = sbr.rel (0) target = $region17
    $region16: #{tpu_custom_call.1} parent=1 // pred_region
      %39 = dma.done [#allocation6], 256
    $region17: #{tpu_custom_call.1} parent=1 // pred_fallthru
      _
    %v40 = vld [vmem:[#allocation2] sm:$0xff]
    %v41 = vld [vmem:[#allocation2 + $0x8] sm:$0xff]
    %v42 = vld [vmem:[#allocation5] sm:$0xff]
    %v43 = vld [vmem:[#allocation5 + $0x8] sm:$0xff]
    %v44 = vmax.f32 %v40, 0.0
    %v45 = vmax.f32 %v41, 0.0
    %v46 = vmul.f32 %v40, %v42
    %v47 = vmul.f32 %v41, %v43
    %v48 = vsub.f32 %v44, %v46
    %v49 = vsub.f32 %v45, %v47
    %v50 = vand.u32 2147483647, %v40
    %v51 = vand.u32 2147483647, %v41
    %v52 = vsub.f32 0.0, %v50
    %v53 = vsub.f32 0.0, %v51
    %v54 = vmul.f32 %v52, 1.442695
    %v55 = vpow.pop %v54
    %v56 = vmul.f32 %v53, 1.442695
    %v57 = vpow.pop %v56
    %v58 = vadd.f32 %v55, 1.0
    %v59 = vlog2.pop %v58
    %v60 = vmul.f32 %v59, 0.6931472
    %v61 = vmul.f32 -0.5, %v55
    %v62 = vadd.f32 %v61, 1.0
    %v63 = vmul.f32 %v62, %v55
    %v64 = vand.u32 2147483647, %v55
    %vm65 = vcmp.lt.f32.partialorder %v64, 0.0004427343
    %v66 = vsel %vm65, %v63, %v60
    %v67 = vadd.f32 %v57, 1.0
    %v68 = vlog2.pop %v67
    %v69 = vmul.f32 %v68, 0.6931472
    %v70 = vmul.f32 -0.5, %v57
    %v71 = vadd.f32 %v70, 1.0
    %v72 = vmul.f32 %v71, %v57
    %v73 = vand.u32 2147483647, %v57
    %vm74 = vcmp.lt.f32.partialorder %v73, 0.0004427343
    %v75 = vsel %vm74, %v72, %v69
    %v76 = vadd.f32 %v48, %v66
    %v77 = vadd.f32 %v49, %v75
    %v78 = vsub.f32 0.0, %v76
    %v79 = vsub.f32 0.0, %v77
    %80 = vst [vmem:[#allocation7] sm:$0xff] %v78
    %81 = vst [vmem:[#allocation7 + $0x8] sm:$0xff] %v79
    // Predicated region
    $region18: #{tpu_custom_call.1} parent=1 // pred_check
      _
    $region19: #{tpu_custom_call.1} parent=1 // pred_check_branch
      %83 = sbr.rel (0) target = $region21
    $region20: #{tpu_custom_call.1} parent=1 // pred_region
      %85 = vsyncadd [#allocation4], 0
      %s87 = sshll.u32 [#allocation7], 4
      %s88 = int_to_ptr.vmem [resolvable:$true] %s87
      %s89 = sshll.u32 %s2, 4
      %s90 = int_to_ptr.hbm [resolvable:$true] %s89
      %92 = dma.vmem_to_hbm [thread:$0]  %s88, 256, %s90, [#allocation4]
    $region21: #{tpu_custom_call.1} parent=1 // pred_fallthru
      _
    // Predicated region
    $region22: #{tpu_custom_call.1} parent=1 // pred_check
      _
    $region23: #{tpu_custom_call.1} parent=1 // pred_check_branch
      %94 = sbr.rel (0) target = $region25
    $region24: #{tpu_custom_call.1} parent=1 // pred_region
      %96 = dma.done [#allocation4], 256
    $region25: #{tpu_custom_call.1} parent=1 // pred_fallthru
      _
    %97 = vsyncpa [#allocation3], 1
    %98 = vsyncpa [#allocation6], 1
    %99 = vsyncpa [#allocation4], 1

</llo_original>
